<compile_context>
chip_gen: v7x
topology: tpu7x:2x2x1
jax: 0.10.0
libtpu: 0.0.40
codegen_flags: <defaults>
</compile_context>

<pallas_src>
import functools

import jax
import jax.numpy as jnp
from jax.experimental import pallas as pl
from jax.experimental.pallas import tpu as pltpu  # noqa: F401  (TPU backend)


def _calprob_kernel(s_ref, sd_ref, s_out_ref, sd_out_ref, *,
                    reset_thres, do_reset):
    """Single grid step over the full (L, pm) parameter stacks.

    s_ref / sd_ref / s_out_ref / sd_out_ref: (L, pm) f32 in VMEM.
    All reductions are per-row (axis=-1), i.e. per layer; Mosaic masks the
    physically padded lanes/sublanes because the block covers the full array.
    """
    s = s_ref[...]            # (L, pm)
    s_dot = sd_ref[...]       # (L, pm)

    # --- s_dot reset: zero any row whose squared norm crosses the threshold.
    if do_reset:
        dot_norm = jnp.sum(s_dot * s_dot, axis=-1, keepdims=True)   # (L, 1)
        s_dot = jnp.where(dot_norm >= reset_thres, 0.0, s_dot)
    sd_out_ref[...] = s_dot

    # --- probabilistic normalization of s (per layer / row).
    mm = jnp.min(s, axis=-1, keepdims=True)                         # (L, 1)
    ss = jnp.where(mm < 0.0, s - mm + 1.0, s)
    denom = jnp.sum(ss, axis=-1, keepdims=True)                     # (L, 1)
    s_out_ref[...] = ss / denom


def calprob_forward_batched(s_all, s_dot_all, options, enabled=True):
    """Batched CALProb.forward() for a stack of layers sharing `options`.

    Args:
      s_all:     (n_layers, pm) float32 — CAL probability parameters.
      s_dot_all: (n_layers, pm) float32 — CAL probability-derivative params.
      options:   dict with static floats 'lambda_s' and 'reset_thres'.
      enabled:   static bool (module's self.enabled flag).

    Returns:
      (s_new, s_dot_new) as (n_layers, pm) float32 arrays (aliased onto the
      input buffers by the pallas_call).
    """
    lambda_s = float(options['lambda_s'])
    rt = float(options['reset_thres'])
    if lambda_s <= 0.0:
        # forward() is a no-op on the parameters in this configuration.
        return s_all, s_dot_all

    if s_all.dtype != jnp.float32:
        s_all = s_all.astype(jnp.float32)
    if s_dot_all.dtype != jnp.float32:
        s_dot_all = s_dot_all.astype(jnp.float32)

    L, pm = s_all.shape
    do_reset = bool(enabled) and (rt > 0.0)
    kernel = functools.partial(_calprob_kernel, reset_thres=rt,
                               do_reset=do_reset)

    # Full-array blocks, single grid step: one input DMA per array, one
    # output DMA per array, zero wrapper-side reshuffling.
    full_spec = pl.BlockSpec((L, pm), lambda i: (0, 0))
    return pl.pallas_call(
        kernel,
        out_shape=(jax.ShapeDtypeStruct((L, pm), jnp.float32),
                   jax.ShapeDtypeStruct((L, pm), jnp.float32)),
        grid=(1,),
        in_specs=[full_spec, full_spec],
        out_specs=(full_spec, full_spec),
        input_output_aliases={0: 0, 1: 1},   # true in-place update (P8)
    )(s_all, s_dot_all)


def calprob_forward(s, s_dot, options, enabled=True):
    """Single-layer convenience wrapper: s, s_dot are (pm,) float32."""
    s_new, sd_new = calprob_forward_batched(s[None, :], s_dot[None, :],
                                            options, enabled)
    return s_new[0], sd_new[0]


def _calprob_forward_ref(s, s_dot, options, enabled=True):
    """Pure-JAX reference mirroring the PyTorch forward() semantics."""
    lambda_s = float(options['lambda_s'])
    rt = float(options['reset_thres'])
    if lambda_s <= 0.0:
        return s, s_dot
    s_dot_new = s_dot
    if enabled and rt > 0.0:
        dot_norm = jnp.sum(s_dot ** 2)
        s_dot_new = jnp.where(dot_norm >= rt, jnp.zeros_like(s_dot), s_dot)
    mm = jnp.min(s)
    ss = jnp.where(mm < 0.0, s - mm + 1.0, s)
    return ss / jnp.sum(ss), s_dot_new


if __name__ == "__main__":
    # pm = 96 (a non-multiple-of-128 conv out-channel count), 12 layers:
    # exercises the non-(8,128)-aligned full-array block and per-row masking.
    n_layers, pm = 12, 96
    options = {'lambda_s': 0.1, 'reset_thres': 0.5, 'zeta_s': 0.5}

    key = jax.random.PRNGKey(0)
    k_s, k_sd = jax.random.split(key)
    # s initialized like the module (uniform 1/pm) plus a perturbation so the
    # negative-min branch and the renormalization are both exercised.
    s_all = jnp.ones((n_layers, pm), jnp.float32) / pm \
        + 0.05 * jax.random.normal(k_s, (n_layers, pm), jnp.float32)
    # Mix of small/large s_dot norms so both sides of the reset branch occur.
    scales = jnp.where(jnp.arange(n_layers) % 2 == 0, 0.02, 0.2)
    s_dot_all = scales[:, None] * jax.random.normal(
        k_sd, (n_layers, pm), jnp.float32)

    s_new, s_dot_new = calprob_forward_batched(s_all, s_dot_all, options,
                                               enabled=True)
    jax.block_until_ready((s_new, s_dot_new))

    # Per-layer pure-JAX reference.
    refs = [_calprob_forward_ref(s_all[i], s_dot_all[i], options, True)
            for i in range(n_layers)]
    s_ref = jnp.stack([r[0] for r in refs])
    sd_ref = jnp.stack([r[1] for r in refs])

    assert jnp.allclose(s_new, s_ref, atol=1e-6, rtol=1e-5)
    assert jnp.allclose(s_dot_new, sd_ref, atol=1e-6, rtol=1e-5)
    assert jnp.allclose(jnp.sum(s_new, axis=-1), 1.0, atol=1e-5)
    assert jnp.all(jnp.isfinite(s_new)) and jnp.all(jnp.isfinite(s_dot_new))

    # Single-layer convenience path.
    s1, sd1 = calprob_forward(s_all[0], s_dot_all[0], options, enabled=True)
    jax.block_until_ready((s1, sd1))
    assert jnp.allclose(s1, s_ref[0], atol=1e-6, rtol=1e-5)
    assert jnp.allclose(sd1, sd_ref[0], atol=1e-6, rtol=1e-5)

    # lambda_s <= 0 path: forward() must be a parameter no-op.
    s_nop, sd_nop = calprob_forward_batched(
        s_all, s_dot_all, {'lambda_s': 0.0, 'reset_thres': 0.5}, enabled=True)
    assert jnp.allclose(s_nop, s_all) and jnp.allclose(sd_nop, s_dot_all)

    # TODO(synk): backward()/compute_mi_approx() and the accumulator methods
    # are training-time utilities outside forward(); not part of this kernel.

    print("KERNEL_OK")
</pallas_src>

<mosaic_0001>
module attributes {stable_mosaic.version = 11 : i64} {
  func.func @_calprob_kernel(%arg0: i32, %arg1: memref<12x96xf32, #tpu.memory_space<vmem>>, %arg2: memref<12x96xf32, #tpu.memory_space<vmem>>, %arg3: memref<12x96xf32, #tpu.memory_space<vmem>>, %arg4: memref<12x96xf32, #tpu.memory_space<vmem>>) attributes {dimension_semantics = [#tpu.dimension_semantics<arbitrary>], iteration_bounds = array<i64: 1>, scalar_prefetch = 0 : i64, scratch_operands = 0 : i64, tpu.core_type = #tpu.core_type<tc>, window_params = [{pipeline_mode = #tpu.pipeline_mode<synchronous>, transform_indices = @transform_0, window_bounds = array<i64: 12, 96>}, {pipeline_mode = #tpu.pipeline_mode<synchronous>, transform_indices = @transform_1, window_bounds = array<i64: 12, 96>}, {pipeline_mode = #tpu.pipeline_mode<synchronous>, transform_indices = @transform_2, window_bounds = array<i64: 12, 96>}, {pipeline_mode = #tpu.pipeline_mode<synchronous>, transform_indices = @transform_3, window_bounds = array<i64: 12, 96>}]} {
    %c0 = arith.constant 0 : index
    %c0_0 = arith.constant 0 : index
    %0 = vector.load %arg1[%c0, %c0_0] : memref<12x96xf32, #tpu.memory_space<vmem>>, vector<12x96xf32>
    %c0_1 = arith.constant 0 : index
    %c0_2 = arith.constant 0 : index
    %1 = vector.load %arg2[%c0_1, %c0_2] : memref<12x96xf32, #tpu.memory_space<vmem>>, vector<12x96xf32>
    %2 = arith.mulf %1, %1 : vector<12x96xf32>
    %cst = arith.constant dense<0.000000e+00> : vector<12xf32>
    %3 = vector.multi_reduction <add>, %2, %cst [1] : vector<12x96xf32> to vector<12xf32>
    %4 = vector.shape_cast %3 : vector<12xf32> to vector<12x1xf32>
    %cst_3 = arith.constant 5.000000e-01 : f32
    %5 = vector.broadcast %cst_3 : f32 to vector<12x1xf32>
    %6 = arith.cmpf oge, %4, %5 : vector<12x1xf32>
    %cst_4 = arith.constant 0.000000e+00 : f32
    %7 = vector.shape_cast %6 : vector<12x1xi1> to vector<12x1xi1>
    %8 = vector.broadcast %7 : vector<12x1xi1> to vector<12x96xi1>
    %9 = vector.broadcast %cst_4 : f32 to vector<12x96xf32>
    %10 = arith.select %8, %9, %1 : vector<12x96xi1>, vector<12x96xf32>
    %c0_5 = arith.constant 0 : index
    %c0_6 = arith.constant 0 : index
    %11 = vector.load %arg4[%c0_5, %c0_6] : memref<12x96xf32, #tpu.memory_space<vmem>>, vector<12x96xf32>
    tpu.vector_store %arg4[%c0_5, %c0_6], %10 {strides = array<i32>} : memref<12x96xf32, #tpu.memory_space<vmem>>, vector<12x96xf32>,
    %cst_7 = arith.constant dense<0x7F800000> : vector<12xf32>
    %12 = vector.multi_reduction <minimumf>, %0, %cst_7 [1] : vector<12x96xf32> to vector<12xf32>
    %13 = vector.shape_cast %12 : vector<12xf32> to vector<12x1xf32>
    %cst_8 = arith.constant 0.000000e+00 : f32
    %14 = vector.broadcast %cst_8 : f32 to vector<12x1xf32>
    %15 = arith.cmpf olt, %13, %14 : vector<12x1xf32>
    %16 = vector.broadcast %13 : vector<12x1xf32> to vector<12x96xf32>
    %17 = arith.subf %0, %16 : vector<12x96xf32>
    %cst_9 = arith.constant 1.000000e+00 : f32
    %18 = vector.broadcast %cst_9 : f32 to vector<12x96xf32>
    %19 = arith.addf %17, %18 : vector<12x96xf32>
    %20 = vector.shape_cast %15 : vector<12x1xi1> to vector<12x1xi1>
    %21 = vector.broadcast %20 : vector<12x1xi1> to vector<12x96xi1>
    %22 = arith.select %21, %19, %0 : vector<12x96xi1>, vector<12x96xf32>
    %cst_10 = arith.constant dense<0.000000e+00> : vector<12xf32>
    %23 = vector.multi_reduction <add>, %22, %cst_10 [1] : vector<12x96xf32> to vector<12xf32>
    %24 = vector.shape_cast %23 : vector<12xf32> to vector<12x1xf32>
    %25 = vector.broadcast %24 : vector<12x1xf32> to vector<12x96xf32>
    %26 = arith.divf %22, %25 : vector<12x96xf32>
    %c0_11 = arith.constant 0 : index
    %c0_12 = arith.constant 0 : index
    %27 = vector.load %arg3[%c0_11, %c0_12] : memref<12x96xf32, #tpu.memory_space<vmem>>, vector<12x96xf32>
    tpu.vector_store %arg3[%c0_11, %c0_12], %26 {strides = array<i32>} : memref<12x96xf32, #tpu.memory_space<vmem>>, vector<12x96xf32>,
    return
  }
  func.func @transform_0(%arg0: i32) -> (i32, i32) {
    %c0_i32 = arith.constant 0 : i32
    %c0_i32_0 = arith.constant 0 : i32
    %c0_i32_1 = arith.constant 0 : i32
    return %c0_i32, %c0_i32_0 : i32, i32
  }
  func.func @transform_1(%arg0: i32) -> (i32, i32) {
    %c0_i32 = arith.constant 0 : i32
    %c0_i32_0 = arith.constant 0 : i32
    %c0_i32_1 = arith.constant 0 : i32
    return %c0_i32, %c0_i32_0 : i32, i32
  }
  func.func @transform_2(%arg0: i32) -> (i32, i32) {
    %c0_i32 = arith.constant 0 : i32
    %c0_i32_0 = arith.constant 0 : i32
    %c0_i32_1 = arith.constant 0 : i32
    return %c0_i32, %c0_i32_0 : i32, i32
  }
  func.func @transform_3(%arg0: i32) -> (i32, i32) {
    %c0_i32 = arith.constant 0 : i32
    %c0_i32_0 = arith.constant 0 : i32
    %c0_i32_1 = arith.constant 0 : i32
    return %c0_i32, %c0_i32_0 : i32, i32
  }
}

</mosaic_0001>

<llo_original>
// kernel: tpu_custom_call.1
$region0: #{tpu_custom_call.1}
  #allocation0 [shape = 'u32[]', space=smem, size = 0x4, offset = 0x4, fixed_abs, tag = 'smem constant byte address 0x4 - core index']
  #allocation1 [shape = 'u32[144,128]{1,0:T(1,128)}', space=vmem, size = 0x12000, scoped, tag = 'internal scratch']
  %s0 = inlined_call_operand.hbm [shape: f32[12,96], index: 0, kind: input, shape index: {}, may-alias: {0,2}]
  %s1 = inlined_call_operand.hbm [shape: f32[12,96], index: 1, kind: input, shape index: {}, may-alias: {1,3}]
  %s2 = inlined_call_operand.hbm [shape: f32[12,96], index: 2, kind: output, shape index: {0}, may-alias: {0,2}]
  %s3 = inlined_call_operand.hbm [shape: f32[12,96], index: 3, kind: output, shape index: {1}, may-alias: {1,3}]
  %4 = xla_tuple %s2, %s3
  %s5 = sld [smem:[#allocation0]]
  $region34: #{tpu_custom_call.1} parent=0
    _
  %s7 = ssub.s32 1, %s5
  %s8 = scalar_select 0, %s7, %s5
  $region1: #{tpu_custom_call.1} parent=0
    #allocation2 [shape = 'u8[8192]{0}', space=vmem, size = 0x2000, scoped, tag = 'input window, operand 0, single buffered']
    #allocation3 [shape = 's32[1]{0}', space=sflag, size = 0x4, scoped, tag = 'scoped memory for tpu_custom_call.1']
    #allocation4 [shape = 's32[1]{0}', space=sflag, size = 0x4, scoped, tag = 'scoped memory for tpu_custom_call.1']
    #allocation5 [shape = 'u8[8192]{0}', space=vmem, size = 0x2000, scoped, tag = 'input window, operand 1, single buffered']
    #allocation6 [shape = 's32[1]{0}', space=sflag, size = 0x4, scoped, tag = 'scoped memory for tpu_custom_call.1']
    #allocation7 [shape = 'u8[8192]{0}', space=vmem, size = 0x2000, scoped, tag = 'output window, operand 0, single buffered']
    #allocation8 [shape = 'u8[8192]{0}', space=vmem, size = 0x2000, scoped, tag = 'output window, operand 1, single buffered']
    #allocation9 [shape = 's32[1]{0}', space=sflag, size = 0x4, scoped, tag = 'scoped memory for tpu_custom_call.1']
    %9 = vsyncpa [#allocation3], 0
    %10 = vsyncpa [#allocation6], 0
    %11 = vsyncpa [#allocation4], 0
    %12 = vsyncpa [#allocation9], 0
    // Predicated region
    $region2: #{tpu_custom_call.1} parent=1 // pred_check
      _
    $region3: #{tpu_custom_call.1} parent=1 // pred_check_branch
      %14 = sbr.rel (0) target = $region5
    $region4: #{tpu_custom_call.1} parent=1 // pred_region
      %s16 = ssub.s32 256, 256
      %17 = vsyncadd [#allocation3], %s16
      %s18 = sshll.u32 [#allocation2], 4
      %s19 = int_to_ptr.vmem [resolvable:$true] %s18
      %24 = dma.hbm_to_vmem [thread:$0]  %s0, 256, %s19, [#allocation3], 128, 128, 8
    $region5: #{tpu_custom_call.1} parent=1 // pred_fallthru
      _
    // Predicated region
    $region6: #{tpu_custom_call.1} parent=1 // pred_check
      _
    $region7: #{tpu_custom_call.1} parent=1 // pred_check_branch
      %26 = sbr.rel (0) target = $region9
    $region8: #{tpu_custom_call.1} parent=1 // pred_region
      %s28 = ssub.s32 256, 256
      %29 = vsyncadd [#allocation6], %s28
      %s30 = sshll.u32 [#allocation5], 4
      %s31 = int_to_ptr.vmem [resolvable:$true] %s30
      %36 = dma.hbm_to_vmem [thread:$0]  %s1, 256, %s31, [#allocation6], 128, 128, 8
    $region9: #{tpu_custom_call.1} parent=1 // pred_fallthru
      _
    // Predicated region
    $region10: #{tpu_custom_call.1} parent=1 // pred_check
      _
    $region11: #{tpu_custom_call.1} parent=1 // pred_check_branch
      %38 = sbr.rel (0) target = $region13
    $region12: #{tpu_custom_call.1} parent=1 // pred_region
      %39 = dma.done [#allocation3], 256
    $region13: #{tpu_custom_call.1} parent=1 // pred_fallthru
      _
    // Predicated region
    $region14: #{tpu_custom_call.1} parent=1 // pred_check
      _
    $region15: #{tpu_custom_call.1} parent=1 // pred_check_branch
      %41 = sbr.rel (0) target = $region17
    $region16: #{tpu_custom_call.1} parent=1 // pred_region
      %42 = dma.done [#allocation6], 256
    $region17: #{tpu_custom_call.1} parent=1 // pred_fallthru
      _
    %v43 = vld [vmem:[#allocation2] sm:$0xff]
    %v44 = vld [vmem:[#allocation2 + $0x8] sm:$0xf]
    %v45 = vld [vmem:[#allocation5] sm:$0xff]
    %v46 = vld [vmem:[#allocation5 + $0x8] sm:$0xf]
    %v47 = vmul.f32 %v45, %v45
    %v48 = vmul.f32 %v46, %v46
    %vm49 = vcmask 785408
    %v50 = vsel %vm49, %v47, 0.0
    %51 = vadd.xlane.f32.xlu0 %v50
    %v52 = vpop.xlane.xlu0 %51
    %vm53 = vcmask 781312
    %v54 = vsel %vm53, %v48, 0.0
    %55 = vadd.xlane.f32.xlu0 %v54
    %v56 = vpop.xlane.xlu0 %55
    %vm57 = vcmp.ge.f32.partialorder %v52, 0.5
    %vm58 = vcmp.ge.f32.partialorder %v56, 0.5
    %v59 = vsel %vm57, 1, 0
    %v60 = vsel %vm58, 1, 0
    %vm61 = vcmp.eq.s32.totalorder %v59, 1
    %vm62 = vcmp.eq.s32.totalorder %v60, 1
    %v63 = vsel %vm61, 0.0, %v45
    %v64 = vsel %vm62, 0.0, %v46
    %65 = vst.msk [vmem:[#allocation8] sm:$0xff] %vm49, %v63
    %66 = vst.msk [vmem:[#allocation8 + $0x8] sm:$0xf] %vm53, %v64
    %v67 = vsel %vm49, %v43, inf
    %68 = vmin.xlane.f32.xlu0 %v67
    %v69 = vpop.xlane.xlu0 %68
    %v70 = vsel %vm53, %v44, inf
    %71 = vmin.xlane.f32.xlu0 %v70
    %v72 = vpop.xlane.xlu0 %71
    %vm73 = vcmp.lt.f32.partialorder %v69, 0.0
    %vm74 = vcmp.lt.f32.partialorder %v72, 0.0
    %v75 = vsub.f32 %v43, %v69
    %v76 = vsub.f32 %v44, %v72
    %v77 = vadd.f32 %v75, 1.0
    %v78 = vadd.f32 %v76, 1.0
    %v79 = vsel %vm73, 1, 0
    %v80 = vsel %vm74, 1, 0
    %vm81 = vcmp.eq.s32.totalorder %v79, 1
    %vm82 = vcmp.eq.s32.totalorder %v80, 1
    %v83 = vsel %vm81, %v77, %v43
    %v84 = vsel %vm82, %v78, %v44
    %v85 = vsel %vm49, %v83, 0.0
    %86 = vadd.xlane.f32.xlu0 %v85
    %v87 = vpop.xlane.xlu0 %86
    %v88 = vsel %vm53, %v84, 0.0
    %89 = vadd.xlane.f32.xlu0 %v88
    %v90 = vpop.xlane.xlu0 %89
    %v91 = vrcp.pop %v87
    %v92 = vmul.f32 %v83, %v91
    %v93 = vrcp.pop %v90
    %v94 = vmul.f32 %v84, %v93
    %95 = vst.msk [vmem:[#allocation7] sm:$0xff] %vm49, %v92
    %96 = vst.msk [vmem:[#allocation7 + $0x8] sm:$0xf] %vm53, %v94
    // Predicated region
    $region18: #{tpu_custom_call.1} parent=1 // pred_check
      _
    $region19: #{tpu_custom_call.1} parent=1 // pred_check_branch
      %98 = sbr.rel (0) target = $region21
    $region20: #{tpu_custom_call.1} parent=1 // pred_region
      %s100 = ssub.s32 256, 256
      %101 = vsyncadd [#allocation4], %s100
      %s102 = sshll.u32 [#allocation7], 4
      %s103 = int_to_ptr.vmem [resolvable:$true] %s102
      %108 = dma.vmem_to_hbm [thread:$0]  %s103, 256, %s2, [#allocation4], 128, 128, 8
    $region21: #{tpu_custom_call.1} parent=1 // pred_fallthru
      _
    // Predicated region
    $region22: #{tpu_custom_call.1} parent=1 // pred_check
      _
    $region23: #{tpu_custom_call.1} parent=1 // pred_check_branch
      %110 = sbr.rel (0) target = $region25
    $region24: #{tpu_custom_call.1} parent=1 // pred_region
      %s112 = ssub.s32 256, 256
      %113 = vsyncadd [#allocation9], %s112
      %s114 = sshll.u32 [#allocation8], 4
      %s115 = int_to_ptr.vmem [resolvable:$true] %s114
      %120 = dma.vmem_to_hbm [thread:$0]  %s115, 256, %s3, [#allocation9], 128, 128, 8
    $region25: #{tpu_custom_call.1} parent=1 // pred_fallthru
      _
    // Predicated region
    $region26: #{tpu_custom_call.1} parent=1 // pred_check
      _
    $region27: #{tpu_custom_call.1} parent=1 // pred_check_branch
      %122 = sbr.rel (0) target = $region29
    $region28: #{tpu_custom_call.1} parent=1 // pred_region
      %123 = dma.done [#allocation4], 256
    $region29: #{tpu_custom_call.1} parent=1 // pred_fallthru
      _
    // Predicated region
    $region30: #{tpu_custom_call.1} parent=1 // pred_check
      _
    $region31: #{tpu_custom_call.1} parent=1 // pred_check_branch
      %125 = sbr.rel (0) target = $region33
    $region32: #{tpu_custom_call.1} parent=1 // pred_region
      %126 = dma.done [#allocation9], 256
    $region33: #{tpu_custom_call.1} parent=1 // pred_fallthru
      _
    %127 = vsyncpa [#allocation3], 1
    %128 = vsyncpa [#allocation6], 1
    %129 = vsyncpa [#allocation4], 1
    %130 = vsyncpa [#allocation9], 1

</llo_original>
